<compile_context>
chip_gen: v6e
topology: v6e:2x2x1
jax: 0.10.0
libtpu: 0.0.40
codegen_flags: <defaults>
</compile_context>

<pallas_src>
import functools

import jax
import jax.numpy as jnp
from jax.experimental import pallas as pl
from jax.experimental.pallas import tpu as pltpu

L = 2                          # number of hidden (input_dim -> input_dim) layers
LANE = 128                     # TPU lane width
SUBLANE = 8                    # TPU sublane width
COMPUTE_DTYPE = jnp.bfloat16   # MXU fast path on v5e/v6e/v7x


def _round_up(x, m):
    return (x + m - 1) // m * m


def mlp_kernel(x_ref, w0_ref, b0_ref, w1_ref, b1_ref, w2_ref, b2_ref, o_ref):
    """Fused 3-layer MLP: bf16 MXU matmuls, f32 accumulate, f32 bias + ReLU epilogue."""
    # Layer 0: input_dim -> input_dim, ReLU
    y = jnp.dot(x_ref[...], w0_ref[...], preferred_element_type=jnp.float32)
    y = jnp.maximum(y + b0_ref[...], 0.0)

    # Layer 1: input_dim -> input_dim, ReLU
    y = jnp.dot(y.astype(COMPUTE_DTYPE), w1_ref[...],
                preferred_element_type=jnp.float32)
    y = jnp.maximum(y + b1_ref[...], 0.0)

    # Final layer: input_dim -> output_dim (no activation)
    y = jnp.dot(y.astype(COMPUTE_DTYPE), w2_ref[...],
                preferred_element_type=jnp.float32)
    y = y + b2_ref[...]

    o_ref[...] = y.astype(o_ref.dtype)


def prepare_params(params):
    """One-time glue, keep OUTSIDE the hot path.

    params: list of (W, b) in PyTorch layout W=[out, in], b=[out].
    Returns list of (W_padded [in_pad, out_pad] bf16, b_padded [1, out_pad] f32),
    with both feature dims zero-padded to multiples of 128 (lane-dense).
    Zero padding is exact: padded columns produce 0, relu(0)=0, and the matching
    padded weight rows of the next layer are 0, so results are bit-identical on
    the un-padded slice.
    """
    prepped = []
    for (w, b) in params:
        fan_out, fan_in = w.shape
        kp = _round_up(fan_in, LANE)
        np_ = _round_up(fan_out, LANE)
        wt = jnp.zeros((kp, np_), COMPUTE_DTYPE).at[:fan_in, :fan_out].set(
            w.T.astype(COMPUTE_DTYPE))
        bp = jnp.zeros((1, np_), jnp.float32).at[0, :fan_out].set(
            b.astype(jnp.float32))
        prepped.append((wt, bp))
    return prepped


@functools.partial(jax.jit, static_argnames=("output_dim", "block_rows"))
def mlp_layer_forward(x, prepared, *, output_dim, block_rows=256):
    """x: [N, input_dim]; prepared: output of prepare_params. Returns [N, output_dim]."""
    n, d = x.shape
    (w0, b0), (w1, b1), (w2, b2) = prepared
    dp = w0.shape[0]   # padded input/hidden dim (multiple of 128)
    op = w2.shape[1]   # padded output dim      (multiple of 128)

    # Per-call glue: cast x to bf16 and zero-pad features to the padded K.
    xk = jnp.pad(x.astype(COMPUTE_DTYPE), ((0, 0), (0, dp - d)))

    # Row tile: big (amortizes ~0.35us/step and fills MXU rows) but clamped to the
    # (sublane-rounded) batch so tiny batches don't allocate an oversized block.
    bm = _round_up(min(block_rows, _round_up(n, SUBLANE)), SUBLANE)
    grid = (pl.cdiv(n, bm),)

    row_spec_in = pl.BlockSpec((bm, dp), lambda i: (i, 0))
    row_spec_out = pl.BlockSpec((bm, op), lambda i: (i, 0))
    # Constant index_map -> weights/biases stay resident in VMEM across the grid.
    # TODO(synk): for very large input_dim (weights approaching v7x's 64 MiB VMEM),
    # add a K-tiled "arbitrary" grid axis with an f32 accumulator instead of
    # loading each full weight.
    full = lambda a: pl.BlockSpec(a.shape, lambda i: (0, 0))

    # Advisory cost estimate for XLA scheduling around the custom call.
    flops = 2 * n * (2 * dp * dp + dp * op)
    const_bytes = sum(int(a.size) * a.dtype.itemsize
                      for a in (w0, b0, w1, b1, w2, b2))
    bytes_accessed = (n * dp * COMPUTE_DTYPE.dtype.itemsize
                      + const_bytes
                      + n * op * x.dtype.itemsize)
    cost = pl.CostEstimate(flops=flops, transcendentals=0,
                           bytes_accessed=bytes_accessed)

    # VMEM budget: double-buffered row tiles + resident weights, capped at 64 MiB
    # so the request is valid on v7x (64 MiB physical) as well as v5e/v6e (128 MiB).
    tile_bytes = bm * dp * COMPUTE_DTYPE.dtype.itemsize + bm * op * x.dtype.itemsize
    vmem_needed = 2 * (const_bytes + tile_bytes) + (4 << 20)
    vmem_limit = int(min(max(vmem_needed, 32 << 20), 64 << 20))

    out_padded = pl.pallas_call(
        mlp_kernel,
        out_shape=jax.ShapeDtypeStruct((n, op), x.dtype),
        grid_spec=pltpu.PrefetchScalarGridSpec(
            num_scalar_prefetch=0,
            grid=grid,
            in_specs=[
                row_spec_in,            # x tile
                full(w0), full(b0),     # layer 0
                full(w1), full(b1),     # layer 1
                full(w2), full(b2),     # final layer
            ],
            out_specs=row_spec_out,
        ),
        compiler_params=pltpu.CompilerParams(
            dimension_semantics=("parallel",),
            vmem_limit_bytes=vmem_limit,
        ),
        cost_estimate=cost,
    )(xk, w0, b0, w1, b1, w2, b2)

    return out_padded[:, :output_dim]


def init_params(key, input_dim, output_dim):
    """Deterministic init mimicking torch.nn.Linear default (uniform +-1/sqrt(fan_in))."""
    dims = [(input_dim, input_dim)] * L + [(input_dim, output_dim)]
    params = []
    for (fan_in, fan_out) in dims:
        key, kw, kb = jax.random.split(key, 3)
        bound = 1.0 / jnp.sqrt(fan_in)
        w = jax.random.uniform(kw, (fan_out, fan_in), jnp.float32, -bound, bound)
        b = jax.random.uniform(kb, (fan_out,), jnp.float32, -bound, bound)
        params.append((w, b))
    return params


def mlp_layer_reference(x, params):
    """Reference with the same numerics as the kernel (bf16 matmul, f32 accumulate)."""
    y = x
    for l in range(L):
        w, b = params[l]
        y = jnp.dot(y.astype(COMPUTE_DTYPE), w.T.astype(COMPUTE_DTYPE),
                    preferred_element_type=jnp.float32)
        y = jnp.maximum(y + b.astype(jnp.float32), 0.0)
    w, b = params[L]
    y = jnp.dot(y.astype(COMPUTE_DTYPE), w.T.astype(COMPUTE_DTYPE),
                preferred_element_type=jnp.float32)
    return (y + b.astype(jnp.float32)).astype(x.dtype)


def mlp_layer_reference_f32(x, params):
    """Pure-f32 reference (the original PyTorch math) for a looser sanity check."""
    y = x
    for l in range(L):
        w, b = params[l]
        y = jnp.maximum(y @ w.T + b, 0.0)
    w, b = params[L]
    return y @ w.T + b


if __name__ == "__main__":
    key = jax.random.PRNGKey(0)
    kx, kp = jax.random.split(key)

    batch = 8
    input_dim = 32
    output_dim = 16

    x = jax.random.normal(kx, (batch, input_dim), jnp.float32)
    params = init_params(kp, input_dim, output_dim)

    prepared = prepare_params(params)           # one-time weight prep (outside jit)
    out = mlp_layer_forward(x, prepared, output_dim=output_dim)
    out = jax.block_until_ready(out)

    assert out.shape == (batch, output_dim), out.shape

    ref_bf16 = mlp_layer_reference(x, params)
    err = float(jnp.max(jnp.abs(out - ref_bf16)))
    assert err < 1e-3, err

    ref_f32 = mlp_layer_reference_f32(x, params)
    err32 = float(jnp.max(jnp.abs(out - ref_f32)))
    assert err32 < 5e-2, err32   # bf16-matmul vs f32 math, expected ~1e-2 scale

    print("KERNEL_OK")
</pallas_src>

<mosaic_0001>
module attributes {stable_mosaic.version = 11 : i64} {
  func.func @mlp_kernel(%arg0: i32, %arg1: memref<8x128xbf16, #tpu.memory_space<vmem>>, %arg2: memref<128x128xbf16, #tpu.memory_space<vmem>>, %arg3: memref<1x128xf32, #tpu.memory_space<vmem>>, %arg4: memref<128x128xbf16, #tpu.memory_space<vmem>>, %arg5: memref<1x128xf32, #tpu.memory_space<vmem>>, %arg6: memref<128x128xbf16, #tpu.memory_space<vmem>>, %arg7: memref<1x128xf32, #tpu.memory_space<vmem>>, %arg8: memref<8x128xf32, #tpu.memory_space<vmem>>) attributes {dimension_semantics = [#tpu.dimension_semantics<parallel>], iteration_bounds = array<i64: 1>, scalar_prefetch = 0 : i64, scratch_operands = 0 : i64, tpu.core_type = #tpu.core_type<tc>, window_params = [{transform_indices = @transform_0, window_bounds = array<i64: 8, 128>}, {pipeline_mode = #tpu.pipeline_mode<synchronous>, transform_indices = @transform_1, window_bounds = array<i64: 128, 128>}, {pipeline_mode = #tpu.pipeline_mode<synchronous>, transform_indices = @transform_2, window_bounds = array<i64: 1, 128>}, {pipeline_mode = #tpu.pipeline_mode<synchronous>, transform_indices = @transform_3, window_bounds = array<i64: 128, 128>}, {pipeline_mode = #tpu.pipeline_mode<synchronous>, transform_indices = @transform_4, window_bounds = array<i64: 1, 128>}, {pipeline_mode = #tpu.pipeline_mode<synchronous>, transform_indices = @transform_5, window_bounds = array<i64: 128, 128>}, {pipeline_mode = #tpu.pipeline_mode<synchronous>, transform_indices = @transform_6, window_bounds = array<i64: 1, 128>}, {transform_indices = @transform_7, window_bounds = array<i64: 8, 128>}]} {
    %c0 = arith.constant 0 : index
    %c0_0 = arith.constant 0 : index
    %0 = vector.load %arg1[%c0, %c0_0] : memref<8x128xbf16, #tpu.memory_space<vmem>>, vector<8x128xbf16>
    %c0_1 = arith.constant 0 : index
    %c0_2 = arith.constant 0 : index
    %1 = vector.load %arg2[%c0_1, %c0_2] : memref<128x128xbf16, #tpu.memory_space<vmem>>, vector<128x128xbf16>
    %cst = arith.constant dense<0.000000e+00> : vector<8x128xf32>
    %2 = tpu.matmul %0, %1, %cst {dimension_numbers = #tpu.dot_dimension_numbers<[1], [0], [0], [1], [0, 0, 1, 1], [], []>} : vector<8x128xbf16>, vector<128x128xbf16>, vector<8x128xf32> -> vector<8x128xf32>
    %c0_3 = arith.constant 0 : index
    %c0_4 = arith.constant 0 : index
    %3 = vector.load %arg3[%c0_3, %c0_4] : memref<1x128xf32, #tpu.memory_space<vmem>>, vector<1x128xf32>
    %4 = vector.broadcast %3 : vector<1x128xf32> to vector<8x128xf32>
    %5 = arith.addf %2, %4 : vector<8x128xf32>
    %cst_5 = arith.constant 0.000000e+00 : f32
    %6 = vector.broadcast %cst_5 : f32 to vector<8x128xf32>
    %7 = arith.maximumf %5, %6 : vector<8x128xf32>
    %8 = arith.truncf %7 : vector<8x128xf32> to vector<8x128xbf16>
    %c0_6 = arith.constant 0 : index
    %c0_7 = arith.constant 0 : index
    %9 = vector.load %arg4[%c0_6, %c0_7] : memref<128x128xbf16, #tpu.memory_space<vmem>>, vector<128x128xbf16>
    %cst_8 = arith.constant dense<0.000000e+00> : vector<8x128xf32>
    %10 = tpu.matmul %8, %9, %cst_8 {dimension_numbers = #tpu.dot_dimension_numbers<[1], [0], [0], [1], [0, 0, 1, 1], [], []>} : vector<8x128xbf16>, vector<128x128xbf16>, vector<8x128xf32> -> vector<8x128xf32>
    %c0_9 = arith.constant 0 : index
    %c0_10 = arith.constant 0 : index
    %11 = vector.load %arg5[%c0_9, %c0_10] : memref<1x128xf32, #tpu.memory_space<vmem>>, vector<1x128xf32>
    %12 = vector.broadcast %11 : vector<1x128xf32> to vector<8x128xf32>
    %13 = arith.addf %10, %12 : vector<8x128xf32>
    %cst_11 = arith.constant 0.000000e+00 : f32
    %14 = vector.broadcast %cst_11 : f32 to vector<8x128xf32>
    %15 = arith.maximumf %13, %14 : vector<8x128xf32>
    %16 = arith.truncf %15 : vector<8x128xf32> to vector<8x128xbf16>
    %c0_12 = arith.constant 0 : index
    %c0_13 = arith.constant 0 : index
    %17 = vector.load %arg6[%c0_12, %c0_13] : memref<128x128xbf16, #tpu.memory_space<vmem>>, vector<128x128xbf16>
    %cst_14 = arith.constant dense<0.000000e+00> : vector<8x128xf32>
    %18 = tpu.matmul %16, %17, %cst_14 {dimension_numbers = #tpu.dot_dimension_numbers<[1], [0], [0], [1], [0, 0, 1, 1], [], []>} : vector<8x128xbf16>, vector<128x128xbf16>, vector<8x128xf32> -> vector<8x128xf32>
    %c0_15 = arith.constant 0 : index
    %c0_16 = arith.constant 0 : index
    %19 = vector.load %arg7[%c0_15, %c0_16] : memref<1x128xf32, #tpu.memory_space<vmem>>, vector<1x128xf32>
    %20 = vector.broadcast %19 : vector<1x128xf32> to vector<8x128xf32>
    %21 = arith.addf %18, %20 : vector<8x128xf32>
    %c0_17 = arith.constant 0 : index
    %c0_18 = arith.constant 0 : index
    %22 = vector.load %arg8[%c0_17, %c0_18] : memref<8x128xf32, #tpu.memory_space<vmem>>, vector<8x128xf32>
    tpu.vector_store %arg8[%c0_17, %c0_18], %21 {strides = array<i32>} : memref<8x128xf32, #tpu.memory_space<vmem>>, vector<8x128xf32>,
    return
  }
  func.func @transform_0(%arg0: i32) -> (i32, i32) {
    %c0_i32 = arith.constant 0 : i32
    %c0_i32_0 = arith.constant 0 : i32
    return %arg0, %c0_i32 : i32, i32
  }
  func.func @transform_1(%arg0: i32) -> (i32, i32) {
    %c0_i32 = arith.constant 0 : i32
    %c0_i32_0 = arith.constant 0 : i32
    %c0_i32_1 = arith.constant 0 : i32
    return %c0_i32, %c0_i32_0 : i32, i32
  }
  func.func @transform_2(%arg0: i32) -> (i32, i32) {
    %c0_i32 = arith.constant 0 : i32
    %c0_i32_0 = arith.constant 0 : i32
    %c0_i32_1 = arith.constant 0 : i32
    return %c0_i32, %c0_i32_0 : i32, i32
  }
  func.func @transform_3(%arg0: i32) -> (i32, i32) {
    %c0_i32 = arith.constant 0 : i32
    %c0_i32_0 = arith.constant 0 : i32
    %c0_i32_1 = arith.constant 0 : i32
    return %c0_i32, %c0_i32_0 : i32, i32
  }
  func.func @transform_4(%arg0: i32) -> (i32, i32) {
    %c0_i32 = arith.constant 0 : i32
    %c0_i32_0 = arith.constant 0 : i32
    %c0_i32_1 = arith.constant 0 : i32
    return %c0_i32, %c0_i32_0 : i32, i32
  }
  func.func @transform_5(%arg0: i32) -> (i32, i32) {
    %c0_i32 = arith.constant 0 : i32
    %c0_i32_0 = arith.constant 0 : i32
    %c0_i32_1 = arith.constant 0 : i32
    return %c0_i32, %c0_i32_0 : i32, i32
  }
  func.func @transform_6(%arg0: i32) -> (i32, i32) {
    %c0_i32 = arith.constant 0 : i32
    %c0_i32_0 = arith.constant 0 : i32
    %c0_i32_1 = arith.constant 0 : i32
    return %c0_i32, %c0_i32_0 : i32, i32
  }
  func.func @transform_7(%arg0: i32) -> (i32, i32) {
    %c0_i32 = arith.constant 0 : i32
    %c0_i32_0 = arith.constant 0 : i32
    return %arg0, %c0_i32 : i32, i32
  }
}

</mosaic_0001>

<llo_original>
// kernel: mlp_layer_forward.1
$region0: #{mlp_layer_forward.1}
  #allocation0 [shape = 'u32[]', space=smem, size = 0x4, offset = 0x4, fixed_abs, tag = 'smem constant byte address 0x4 - core index']
  #allocation1 [shape = 'u32[144,128]{1,0:T(1,128)}', space=vmem, size = 0x12000, scoped, tag = 'internal scratch']
  %s0 = inlined_call_operand.vmem [shape: bf16[8,128], index: 0, kind: input, shape index: {}]
  %s1 = inlined_call_operand.hbm [shape: bf16[128,128], index: 1, kind: input, shape index: {}]
  %s2 = inlined_call_operand.vmem [shape: f32[1,128], index: 2, kind: input, shape index: {}]
  %s3 = inlined_call_operand.hbm [shape: bf16[128,128], index: 3, kind: input, shape index: {}]
  %s4 = inlined_call_operand.vmem [shape: f32[1,128], index: 4, kind: input, shape index: {}]
  %s5 = inlined_call_operand.hbm [shape: bf16[128,128], index: 5, kind: input, shape index: {}]
  %s6 = inlined_call_operand.vmem [shape: f32[1,128], index: 6, kind: input, shape index: {}]
  %s7 = inlined_call_operand.hbm [shape: f32[8,128], index: 7, kind: output, shape index: {}]
  %s8 = sld [smem:[#allocation0]]
  $region50: #{mlp_layer_forward.1} parent=0
    _
  %s10 = ssub.s32 1, %s8
  %s11 = scalar_select 0, %s10, %s8
  $region1: #{mlp_layer_forward.1} parent=0
    #allocation2 [shape = 'u8[32768]{0}', space=vmem, size = 0x8000, scoped, tag = 'input window, operand 1, single buffered']
    #allocation3 [shape = 's32[1]{0}', space=sflag, size = 0x4, scoped, tag = 'scoped memory for mlp_layer_forward.1']
    #allocation4 [shape = 's32[1]{0}', space=sflag, size = 0x4, scoped, tag = 'scoped memory for mlp_layer_forward.1']
    #allocation5 [shape = 'u8[32768]{0}', space=vmem, size = 0x8000, scoped, tag = 'input window, operand 3, single buffered']
    #allocation6 [shape = 's32[1]{0}', space=sflag, size = 0x4, scoped, tag = 'scoped memory for mlp_layer_forward.1']
    #allocation7 [shape = 'u8[32768]{0}', space=vmem, size = 0x8000, scoped, tag = 'input window, operand 5, single buffered']
    #allocation8 [shape = 'u8[4096]{0}', space=vmem, size = 0x1000, scoped, tag = 'output window, operand 0, single buffered']
    %12 = vsyncpa [#allocation3], 0
    %13 = vsyncpa [#allocation6], 0
    %14 = vsyncpa [#allocation4], 0
    // Predicated region
    $region2: #{mlp_layer_forward.1} parent=1 // pred_check
      _
    $region3: #{mlp_layer_forward.1} parent=1 // pred_check_branch
      %16 = sbr.rel (0) target = $region5
    $region4: #{mlp_layer_forward.1} parent=1 // pred_region
      _
    $region5: #{mlp_layer_forward.1} parent=1 // pred_fallthru
      _
    // Predicated region
    $region6: #{mlp_layer_forward.1} parent=1 // pred_check
      _
    $region7: #{mlp_layer_forward.1} parent=1 // pred_check_branch
      %18 = sbr.rel (0) target = $region9
    $region8: #{mlp_layer_forward.1} parent=1 // pred_region
      %s20 = ssub.s32 1024, 1024
      %21 = vsyncadd [#allocation3], %s20
      %s22 = sshll.u32 [#allocation2], 4
      %s23 = int_to_ptr.vmem [resolvable:$true] %s22
      %28 = dma.hbm_to_vmem [thread:$0]  %s1, 1024, %s23, [#allocation3], 64, 64, 4
    $region9: #{mlp_layer_forward.1} parent=1 // pred_fallthru
      _
    // Predicated region
    $region10: #{mlp_layer_forward.1} parent=1 // pred_check
      _
    $region11: #{mlp_layer_forward.1} parent=1 // pred_check_branch
      %30 = sbr.rel (0) target = $region13
    $region12: #{mlp_layer_forward.1} parent=1 // pred_region
      _
    $region13: #{mlp_layer_forward.1} parent=1 // pred_fallthru
      _
    // Predicated region
    $region14: #{mlp_layer_forward.1} parent=1 // pred_check
      _
    $region15: #{mlp_layer_forward.1} parent=1 // pred_check_branch
      %32 = sbr.rel (0) target = $region17
    $region16: #{mlp_layer_forward.1} parent=1 // pred_region
      %s34 = ssub.s32 1024, 1024
      %35 = vsyncadd [#allocation6], %s34
      %s36 = sshll.u32 [#allocation5], 4
      %s37 = int_to_ptr.vmem [resolvable:$true] %s36
      %42 = dma.hbm_to_vmem [thread:$0]  %s3, 1024, %s37, [#allocation6], 64, 64, 4
    $region17: #{mlp_layer_forward.1} parent=1 // pred_fallthru
      _
    // Predicated region
    $region18: #{mlp_layer_forward.1} parent=1 // pred_check
      _
    $region19: #{mlp_layer_forward.1} parent=1 // pred_check_branch
      %44 = sbr.rel (0) target = $region21
    $region20: #{mlp_layer_forward.1} parent=1 // pred_region
      _
    $region21: #{mlp_layer_forward.1} parent=1 // pred_fallthru
      _
    // Predicated region
    $region22: #{mlp_layer_forward.1} parent=1 // pred_check
      _
    $region23: #{mlp_layer_forward.1} parent=1 // pred_check_branch
      %46 = sbr.rel (0) target = $region25
    $region24: #{mlp_layer_forward.1} parent=1 // pred_region
      %s48 = ssub.s32 1024, 1024
      %49 = vsyncadd [#allocation6], %s48
      %s50 = sshll.u32 [#allocation7], 4
      %s51 = int_to_ptr.vmem [resolvable:$true] %s50
      %56 = dma.hbm_to_vmem [thread:$0]  %s5, 1024, %s51, [#allocation6], 64, 64, 4
    $region25: #{mlp_layer_forward.1} parent=1 // pred_fallthru
      _
    // Predicated region
    $region26: #{mlp_layer_forward.1} parent=1 // pred_check
      _
    $region27: #{mlp_layer_forward.1} parent=1 // pred_check_branch
      %58 = sbr.rel (0) target = $region29
    $region28: #{mlp_layer_forward.1} parent=1 // pred_region
      _
    $region29: #{mlp_layer_forward.1} parent=1 // pred_fallthru
      _
    // Predicated region
    $region30: #{mlp_layer_forward.1} parent=1 // pred_check
      _
    $region31: #{mlp_layer_forward.1} parent=1 // pred_check_branch
      %60 = sbr.rel (0) target = $region33
    $region32: #{mlp_layer_forward.1} parent=1 // pred_region
      %61 = dma.done [#allocation3], 1024
    $region33: #{mlp_layer_forward.1} parent=1 // pred_fallthru
      _
    // Predicated region
    $region34: #{mlp_layer_forward.1} parent=1 // pred_check
      _
    $region35: #{mlp_layer_forward.1} parent=1 // pred_check_branch
      %63 = sbr.rel (0) target = $region37
    $region36: #{mlp_layer_forward.1} parent=1 // pred_region
      %64 = dma.done [#allocation6], 1024
    $region37: #{mlp_layer_forward.1} parent=1 // pred_fallthru
      _
    // Predicated region
    $region38: #{mlp_layer_forward.1} parent=1 // pred_check
      _
    $region39: #{mlp_layer_forward.1} parent=1 // pred_check_branch
      %66 = sbr.rel (0) target = $region41
    $region40: #{mlp_layer_forward.1} parent=1 // pred_region
      %67 = dma.done [#allocation6], 1024
    $region41: #{mlp_layer_forward.1} parent=1 // pred_fallthru
      _
    %v69 = vld [vmem:[%s0] sm:$0xf]
    %v70 = vld [vmem:[#allocation2] sm:$0xf]
    %v71 = vld [vmem:[#allocation2 + $0x4] sm:$0xf]
    %v72 = vld [vmem:[#allocation2 + $0x8] sm:$0xf]
    %v73 = vld [vmem:[#allocation2 + $0xc] sm:$0xf]
    %v74 = vld [vmem:[#allocation2 + $0x10] sm:$0xf]
    %v75 = vld [vmem:[#allocation2 + $0x14] sm:$0xf]
    %v76 = vld [vmem:[#allocation2 + $0x18] sm:$0xf]
    %v77 = vld [vmem:[#allocation2 + $0x1c] sm:$0xf]
    %v78 = vld [vmem:[#allocation2 + $0x20] sm:$0xf]
    %v79 = vld [vmem:[#allocation2 + $0x24] sm:$0xf]
    %v80 = vld [vmem:[#allocation2 + $0x28] sm:$0xf]
    %v81 = vld [vmem:[#allocation2 + $0x2c] sm:$0xf]
    %v82 = vld [vmem:[#allocation2 + $0x30] sm:$0xf]
    %v83 = vld [vmem:[#allocation2 + $0x34] sm:$0xf]
    %v84 = vld [vmem:[#allocation2 + $0x38] sm:$0xf]
    %v85 = vld [vmem:[#allocation2 + $0x3c] sm:$0xf]
    %v86 = vld [vmem:[%s2] sm:$0x1]
    %v88 = vlaneseq
    %v89 = vshrl.u32 %v88, 7
    %v90 = vsub.s32 0, %v89
    %v91 = vrot.slane %v86, %v90
    %v109 = vunpack.c.l.b16 %v70
    %v110 = vunpack.c.l.b16 %v71
    %v111 = vunpack.c.l.b16 %v72
    %v112 = vunpack.c.l.b16 %v73
    %v113 = vunpack.c.l.b16 %v74
    %v114 = vunpack.c.l.b16 %v75
    %v115 = vunpack.c.l.b16 %v76
    %v116 = vunpack.c.l.b16 %v77
    %v117 = vunpack.c.l.b16 %v78
    %v118 = vunpack.c.l.b16 %v79
    %v119 = vunpack.c.l.b16 %v80
    %v120 = vunpack.c.l.b16 %v81
    %v121 = vunpack.c.l.b16 %v82
    %v122 = vunpack.c.l.b16 %v83
    %v123 = vunpack.c.l.b16 %v84
    %v124 = vunpack.c.l.b16 %v85
    %v125 = vpack.c.b16 %v110, %v109
    %v126 = vpack.c.b16 %v112, %v111
    %v127 = vpack.c.b16 %v114, %v113
    %v128 = vpack.c.b16 %v116, %v115
    %v129 = vpack.c.b16 %v118, %v117
    %v130 = vpack.c.b16 %v120, %v119
    %v131 = vpack.c.b16 %v122, %v121
    %v132 = vpack.c.b16 %v124, %v123
    %141 = vmatprep.subr.bf16.mxu0 0
    %142 = vmatpush1.bf16.msra.mxu0 %v132
    %143 = vmatprep.subr.bf16.mxu0 0
    %144 = vmatpush1.bf16.msra.mxu0 %v131
    %145 = vmatprep.subr.bf16.mxu0 0
    %146 = vmatpush1.bf16.msra.mxu0 %v130
    %147 = vmatprep.subr.bf16.mxu0 0
    %148 = vmatpush1.bf16.msra.mxu0 %v129
    %149 = vmatprep.subr.bf16.mxu0 0
    %150 = vmatpush1.bf16.msra.mxu0 %v128
    %151 = vmatprep.subr.bf16.mxu0 0
    %152 = vmatpush1.bf16.msra.mxu0 %v127
    %153 = vmatprep.subr.bf16.mxu0 0
    %154 = vmatpush1.bf16.msra.mxu0 %v126
    %155 = vmatprep.subr.bf16.mxu0 0
    %156 = vmatpush1.bf16.msra.mxu0 %v125
    %157 = vmatprep.subr.bf16.mxu0 0
    %158 = vmatpush2.bf16.msra.mxu0 0
    %159 = vmatprep.subr.bf16.mxu0 0
    %160 = vmatpush2.bf16.msra.mxu0 0
    %161 = vmatprep.subr.bf16.mxu0 0
    %162 = vmatpush2.bf16.msra.mxu0 0
    %163 = vmatprep.subr.bf16.mxu0 0
    %164 = vmatpush2.bf16.msra.mxu0 0
    %165 = vmatprep.subr.bf16.mxu0 0
    %166 = vmatpush2.bf16.msra.mxu0 0
    %167 = vmatprep.subr.bf16.mxu0 0
    %168 = vmatpush2.bf16.msra.mxu0 0
    %169 = vmatprep.subr.bf16.mxu0 0
    %170 = vmatpush2.bf16.msra.mxu0 0
    %171 = vmatprep.subr.bf16.mxu0 0
    %172 = vmatpush2.bf16.msra.mxu0 0
    %173 = vmatprep.mubr.bf16.mxu0 0
    %174 = vmatmul.mubr.bf16.gmra.mxu0 %v69
    %v175 = vpop.f32.mrf.mxu0
    %v176 = vadd.f32 %v91, %v175
    %v177 = vpop.f32.mrf.mxu0
    %v178 = vpop.f32.mrf.mxu0
    %v179 = vpop.f32.mrf.mxu0
    %180 = vdwg.mxu0
    %v181 = vmax.f32 %v176, 0.0
    %v182 = vpack.c.bf16 %v181, %v181
    %v183 = vld [vmem:[#allocation5] sm:$0xf]
    %v184 = vld [vmem:[#allocation5 + $0x4] sm:$0xf]
    %v185 = vld [vmem:[#allocation5 + $0x8] sm:$0xf]
    %v186 = vld [vmem:[#allocation5 + $0xc] sm:$0xf]
    %v187 = vld [vmem:[#allocation5 + $0x10] sm:$0xf]
    %v188 = vld [vmem:[#allocation5 + $0x14] sm:$0xf]
    %v189 = vld [vmem:[#allocation5 + $0x18] sm:$0xf]
    %v190 = vld [vmem:[#allocation5 + $0x1c] sm:$0xf]
    %v191 = vld [vmem:[#allocation5 + $0x20] sm:$0xf]
    %v192 = vld [vmem:[#allocation5 + $0x24] sm:$0xf]
    %v193 = vld [vmem:[#allocation5 + $0x28] sm:$0xf]
    %v194 = vld [vmem:[#allocation5 + $0x2c] sm:$0xf]
    %v195 = vld [vmem:[#allocation5 + $0x30] sm:$0xf]
    %v196 = vld [vmem:[#allocation5 + $0x34] sm:$0xf]
    %v197 = vld [vmem:[#allocation5 + $0x38] sm:$0xf]
    %v198 = vld [vmem:[#allocation5 + $0x3c] sm:$0xf]
    %v199 = vld [vmem:[%s4] sm:$0x1]
    %v201 = vlaneseq
    %v202 = vshrl.u32 %v201, 7
    %v203 = vsub.s32 0, %v202
    %v204 = vrot.slane %v199, %v203
    %v222 = vunpack.c.l.b16 %v183
    %v223 = vunpack.c.l.b16 %v184
    %v224 = vunpack.c.l.b16 %v185
    %v225 = vunpack.c.l.b16 %v186
    %v226 = vunpack.c.l.b16 %v187
    %v227 = vunpack.c.l.b16 %v188
    %v228 = vunpack.c.l.b16 %v189
    %v229 = vunpack.c.l.b16 %v190
    %v230 = vunpack.c.l.b16 %v191
    %v231 = vunpack.c.l.b16 %v192
    %v232 = vunpack.c.l.b16 %v193
    %v233 = vunpack.c.l.b16 %v194
    %v234 = vunpack.c.l.b16 %v195
    %v235 = vunpack.c.l.b16 %v196
    %v236 = vunpack.c.l.b16 %v197
    %v237 = vunpack.c.l.b16 %v198
    %v238 = vpack.c.b16 %v223, %v222
    %v239 = vpack.c.b16 %v225, %v224
    %v240 = vpack.c.b16 %v227, %v226
    %v241 = vpack.c.b16 %v229, %v228
    %v242 = vpack.c.b16 %v231, %v230
    %v243 = vpack.c.b16 %v233, %v232
    %v244 = vpack.c.b16 %v235, %v234
    %v245 = vpack.c.b16 %v237, %v236
    %254 = vmatprep.subr.bf16.mxu0 0
    %255 = vmatpush1.bf16.msra.mxu0 %v245
    %256 = vmatprep.subr.bf16.mxu0 0
    %257 = vmatpush1.bf16.msra.mxu0 %v244
    %258 = vmatprep.subr.bf16.mxu0 0
    %259 = vmatpush1.bf16.msra.mxu0 %v243
    %260 = vmatprep.subr.bf16.mxu0 0
    %261 = vmatpush1.bf16.msra.mxu0 %v242
    %262 = vmatprep.subr.bf16.mxu0 0
    %263 = vmatpush1.bf16.msra.mxu0 %v241
    %264 = vmatprep.subr.bf16.mxu0 0
    %265 = vmatpush1.bf16.msra.mxu0 %v240
    %266 = vmatprep.subr.bf16.mxu0 0
    %267 = vmatpush1.bf16.msra.mxu0 %v239
    %268 = vmatprep.subr.bf16.mxu0 0
    %269 = vmatpush1.bf16.msra.mxu0 %v238
    %270 = vmatprep.subr.bf16.mxu0 0
    %271 = vmatpush2.bf16.msra.mxu0 0
    %272 = vmatprep.subr.bf16.mxu0 0
    %273 = vmatpush2.bf16.msra.mxu0 0
    %274 = vmatprep.subr.bf16.mxu0 0
    %275 = vmatpush2.bf16.msra.mxu0 0
    %276 = vmatprep.subr.bf16.mxu0 0
    %277 = vmatpush2.bf16.msra.mxu0 0
    %278 = vmatprep.subr.bf16.mxu0 0
    %279 = vmatpush2.bf16.msra.mxu0 0
    %280 = vmatprep.subr.bf16.mxu0 0
    %281 = vmatpush2.bf16.msra.mxu0 0
    %282 = vmatprep.subr.bf16.mxu0 0
    %283 = vmatpush2.bf16.msra.mxu0 0
    %284 = vmatprep.subr.bf16.mxu0 0
    %285 = vmatpush2.bf16.msra.mxu0 0
    %286 = vmatprep.mubr.bf16.mxu0 0
    %287 = vmatmul.mubr.bf16.gmra.mxu0 %v182
    %v288 = vpop.f32.mrf.mxu0
    %v289 = vadd.f32 %v204, %v288
    %v290 = vpop.f32.mrf.mxu0
    %v291 = vpop.f32.mrf.mxu0
    %v292 = vpop.f32.mrf.mxu0
    %293 = vdwg.mxu0
    %v294 = vmax.f32 %v289, 0.0
    %v295 = vpack.c.bf16 %v294, %v294
    %v296 = vld [vmem:[#allocation7] sm:$0xf]
    %v297 = vld [vmem:[#allocation7 + $0x4] sm:$0xf]
    %v298 = vld [vmem:[#allocation7 + $0x8] sm:$0xf]
    %v299 = vld [vmem:[#allocation7 + $0xc] sm:$0xf]
    %v300 = vld [vmem:[#allocation7 + $0x10] sm:$0xf]
    %v301 = vld [vmem:[#allocation7 + $0x14] sm:$0xf]
    %v302 = vld [vmem:[#allocation7 + $0x18] sm:$0xf]
    %v303 = vld [vmem:[#allocation7 + $0x1c] sm:$0xf]
    %v304 = vld [vmem:[#allocation7 + $0x20] sm:$0xf]
    %v305 = vld [vmem:[#allocation7 + $0x24] sm:$0xf]
    %v306 = vld [vmem:[#allocation7 + $0x28] sm:$0xf]
    %v307 = vld [vmem:[#allocation7 + $0x2c] sm:$0xf]
    %v308 = vld [vmem:[#allocation7 + $0x30] sm:$0xf]
    %v309 = vld [vmem:[#allocation7 + $0x34] sm:$0xf]
    %v310 = vld [vmem:[#allocation7 + $0x38] sm:$0xf]
    %v311 = vld [vmem:[#allocation7 + $0x3c] sm:$0xf]
    %v312 = vld [vmem:[%s6] sm:$0x1]
    %v314 = vlaneseq
    %v315 = vshrl.u32 %v314, 7
    %v316 = vsub.s32 0, %v315
    %v317 = vrot.slane %v312, %v316
    %v335 = vunpack.c.l.b16 %v296
    %v336 = vunpack.c.l.b16 %v297
    %v337 = vunpack.c.l.b16 %v298
    %v338 = vunpack.c.l.b16 %v299
    %v339 = vunpack.c.l.b16 %v300
    %v340 = vunpack.c.l.b16 %v301
    %v341 = vunpack.c.l.b16 %v302
    %v342 = vunpack.c.l.b16 %v303
    %v343 = vunpack.c.l.b16 %v304
    %v344 = vunpack.c.l.b16 %v305
    %v345 = vunpack.c.l.b16 %v306
    %v346 = vunpack.c.l.b16 %v307
    %v347 = vunpack.c.l.b16 %v308
    %v348 = vunpack.c.l.b16 %v309
    %v349 = vunpack.c.l.b16 %v310
    %v350 = vunpack.c.l.b16 %v311
    %v351 = vpack.c.b16 %v336, %v335
    %v352 = vpack.c.b16 %v338, %v337
    %v353 = vpack.c.b16 %v340, %v339
    %v354 = vpack.c.b16 %v342, %v341
    %v355 = vpack.c.b16 %v344, %v343
    %v356 = vpack.c.b16 %v346, %v345
    %v357 = vpack.c.b16 %v348, %v347
    %v358 = vpack.c.b16 %v350, %v349
    %367 = vmatprep.subr.bf16.mxu0 0
    %368 = vmatpush1.bf16.msra.mxu0 %v358
    %369 = vmatprep.subr.bf16.mxu0 0
    %370 = vmatpush1.bf16.msra.mxu0 %v357
    %371 = vmatprep.subr.bf16.mxu0 0
    %372 = vmatpush1.bf16.msra.mxu0 %v356
    %373 = vmatprep.subr.bf16.mxu0 0
    %374 = vmatpush1.bf16.msra.mxu0 %v355
    %375 = vmatprep.subr.bf16.mxu0 0
    %376 = vmatpush1.bf16.msra.mxu0 %v354
    %377 = vmatprep.subr.bf16.mxu0 0
    %378 = vmatpush1.bf16.msra.mxu0 %v353
    %379 = vmatprep.subr.bf16.mxu0 0
    %380 = vmatpush1.bf16.msra.mxu0 %v352
    %381 = vmatprep.subr.bf16.mxu0 0
    %382 = vmatpush1.bf16.msra.mxu0 %v351
    %383 = vmatprep.subr.bf16.mxu0 0
    %384 = vmatpush2.bf16.msra.mxu0 0
    %385 = vmatprep.subr.bf16.mxu0 0
    %386 = vmatpush2.bf16.msra.mxu0 0
    %387 = vmatprep.subr.bf16.mxu0 0
    %388 = vmatpush2.bf16.msra.mxu0 0
    %389 = vmatprep.subr.bf16.mxu0 0
    %390 = vmatpush2.bf16.msra.mxu0 0
    %391 = vmatprep.subr.bf16.mxu0 0
    %392 = vmatpush2.bf16.msra.mxu0 0
    %393 = vmatprep.subr.bf16.mxu0 0
    %394 = vmatpush2.bf16.msra.mxu0 0
    %395 = vmatprep.subr.bf16.mxu0 0
    %396 = vmatpush2.bf16.msra.mxu0 0
    %397 = vmatprep.subr.bf16.mxu0 0
    %398 = vmatpush2.bf16.msra.mxu0 0
    %399 = vmatprep.mubr.bf16.mxu0 0
    %400 = vmatmul.mubr.bf16.gmra.mxu0 %v295
    %v401 = vpop.f32.mrf.mxu0
    %v402 = vadd.f32 %v317, %v401
    %v403 = vpop.f32.mrf.mxu0
    %v404 = vpop.f32.mrf.mxu0
    %v405 = vpop.f32.mrf.mxu0
    %406 = vdwg.mxu0
    %407 = vst [vmem:[#allocation8] sm:$0xff] %v402
    // Predicated region
    $region42: #{mlp_layer_forward.1} parent=1 // pred_check
      _
    $region43: #{mlp_layer_forward.1} parent=1 // pred_check_branch
      %409 = sbr.rel (0) target = $region45
    $region44: #{mlp_layer_forward.1} parent=1 // pred_region
      %s411 = ssub.s32 128, 128
      %412 = vsyncadd [#allocation4], %s411
      %s414 = sshll.u32 [#allocation8], 4
      %s415 = int_to_ptr.vmem [resolvable:$true] %s414
      %417 = dma.vmem_to_hbm [thread:$0]  %s415, 128, %s7, [#allocation4]
    $region45: #{mlp_layer_forward.1} parent=1 // pred_fallthru
      _
    // Predicated region
    $region46: #{mlp_layer_forward.1} parent=1 // pred_check
      _
    $region47: #{mlp_layer_forward.1} parent=1 // pred_check_branch
      %419 = sbr.rel (0) target = $region49
    $region48: #{mlp_layer_forward.1} parent=1 // pred_region
      %420 = dma.done [#allocation4], 128
    $region49: #{mlp_layer_forward.1} parent=1 // pred_fallthru
      _
    %421 = vsyncpa [#allocation3], 1
    %422 = vsyncpa [#allocation6], 1
    %423 = vsyncpa [#allocation4], 1

</llo_original>
